<compile_context>
chip_gen: v7x
topology: tpu7x:2x2x1
jax: 0.10.0
libtpu: 0.0.40
codegen_flags: <defaults>
</compile_context>

<pallas_src>
import functools

import jax
import jax.numpy as jnp
from jax.experimental import pallas as pl
from jax.experimental.pallas import tpu as pltpu

LOG_STD_MIN = -20.0
LOG_STD_MAX = 2.0
HIDDEN = 128


def _round_up(x, m):
    return ((x + m - 1) // m) * m


def policy_net_kernel(x_ref, w1_ref, b1_ref, w2_ref, b2_ref,
                      wm_ref, bm_ref, ws_ref, bs_ref,
                      mean_ref, log_std_ref, *, compute_dtype):
    # One batch tile: x_ref is (TB, state_dim); all weights/biases are resident
    # in VMEM (constant index_maps).  Matmul operands are cast to compute_dtype
    # (bf16 by default) with f32 accumulation; biases/epilogue stay f32.
    x = x_ref[...].astype(compute_dtype)

    # linear1 + relu   (state_dim -> 128)
    h1 = jnp.dot(x, w1_ref[...], preferred_element_type=jnp.float32) + b1_ref[...]
    h1 = jnp.maximum(h1, 0.0).astype(compute_dtype)

    # linear2 + relu   (128 -> 128)
    h2 = jnp.dot(h1, w2_ref[...], preferred_element_type=jnp.float32) + b2_ref[...]
    h2 = jnp.maximum(h2, 0.0).astype(compute_dtype)

    # heads            (128 -> action_dim each), stored lane-exact.
    mean = jnp.dot(h2, wm_ref[...], preferred_element_type=jnp.float32) + bm_ref[...]
    log_std = jnp.dot(h2, ws_ref[...], preferred_element_type=jnp.float32) + bs_ref[...]

    mean_ref[...] = mean.astype(mean_ref.dtype)
    log_std_ref[...] = jnp.clip(log_std, LOG_STD_MIN, LOG_STD_MAX).astype(log_std_ref.dtype)


def policy_net_forward(state, params, *, tb_max=1024, use_bf16=True):
    """state: [B, state_dim] float32. Returns (mean, log_std), each [B, action_dim]."""
    B, state_dim = state.shape
    hidden = params["w1"].shape[1]
    action_dim = params["wm"].shape[1]
    compute_dtype = jnp.bfloat16 if use_bf16 else jnp.float32

    # ---- weights: cast once wrapper-side (biases stay f32) ----
    w1 = params["w1"].astype(compute_dtype)
    w2 = params["w2"].astype(compute_dtype)
    wm = params["wm"].astype(compute_dtype)
    ws = params["ws"].astype(compute_dtype)
    b1, b2, bm, bs = params["b1"], params["b2"], params["bm"], params["bs"]

    # ---- batch tiling ----
    # Even division of the (8-rounded) batch into tiles; >= 2 grid steps when the
    # batch is big enough so v7x can shard the "parallel" axis across both TCs.
    B8 = _round_up(max(B, 1), 8)
    min_grid = 2 if B8 > 8 else 1
    grid_b = max(pl.cdiv(B8, tb_max), min_grid)
    TB = _round_up(pl.cdiv(B8, grid_b), 8)
    grid_b = pl.cdiv(B8, TB)
    if grid_b == 1:
        TB = B                      # single tile spans the exact batch -> no padding
    B_total = grid_b * TB

    # Pad the batch only when needed (state_dim is never padded: the blocks span it).
    x = state if B_total == B else jnp.pad(state, ((0, B_total - B), (0, 0)))

    kernel = functools.partial(policy_net_kernel, compute_dtype=compute_dtype)

    mean, log_std = pl.pallas_call(
        kernel,
        out_shape=(
            jax.ShapeDtypeStruct((B_total, action_dim), jnp.float32),
            jax.ShapeDtypeStruct((B_total, action_dim), jnp.float32),
        ),
        grid=(grid_b,),
        in_specs=[
            pl.BlockSpec((TB, state_dim), lambda i: (i, 0)),      # x: tiled over batch
            pl.BlockSpec((state_dim, hidden), lambda i: (0, 0)),  # w1: resident
            pl.BlockSpec((1, hidden), lambda i: (0, 0)),          # b1
            pl.BlockSpec((hidden, hidden), lambda i: (0, 0)),     # w2
            pl.BlockSpec((1, hidden), lambda i: (0, 0)),          # b2
            pl.BlockSpec((hidden, action_dim), lambda i: (0, 0)),  # wm
            pl.BlockSpec((1, action_dim), lambda i: (0, 0)),       # bm
            pl.BlockSpec((hidden, action_dim), lambda i: (0, 0)),  # ws
            pl.BlockSpec((1, action_dim), lambda i: (0, 0)),       # bs
        ],
        out_specs=(
            pl.BlockSpec((TB, action_dim), lambda i: (i, 0)),      # mean
            pl.BlockSpec((TB, action_dim), lambda i: (i, 0)),      # log_std
        ),
        compiler_params=pltpu.CompilerParams(
            dimension_semantics=("parallel",),
        ),
    )(x, w1, b1, w2, b2, wm, bm, ws, bs)

    if B_total != B:
        mean, log_std = mean[:B], log_std[:B]
    return mean, log_std


def init_policy_net_params(key, state_dim, action_dim, edge=0.003, hidden=HIDDEN):
    """Deterministic parameter init mirroring nn.Linear defaults / uniform(-edge, edge)
    for the two output heads. Weights stored as [in, out] (already transposed)."""
    ks = jax.random.split(key, 8)

    def linear_init(kw, kb, fan_in, fan_out):
        bound = 1.0 / jnp.sqrt(jnp.float32(fan_in))
        w = jax.random.uniform(kw, (fan_in, fan_out), jnp.float32, -bound, bound)
        b = jax.random.uniform(kb, (1, fan_out), jnp.float32, -bound, bound)
        return w, b

    w1, b1 = linear_init(ks[0], ks[1], state_dim, hidden)
    w2, b2 = linear_init(ks[2], ks[3], hidden, hidden)
    wm = jax.random.uniform(ks[4], (hidden, action_dim), jnp.float32, -edge, edge)
    bm = jax.random.uniform(ks[5], (1, action_dim), jnp.float32, -edge, edge)
    ws = jax.random.uniform(ks[6], (hidden, action_dim), jnp.float32, -edge, edge)
    bs = jax.random.uniform(ks[7], (1, action_dim), jnp.float32, -edge, edge)

    return {"w1": w1, "b1": b1, "w2": w2, "b2": b2,
            "wm": wm, "bm": bm, "ws": ws, "bs": bs}


def policy_net_forward_ref(state, params):
    """Pure-JAX reference (same math as the PyTorch forward)."""
    hi = jax.lax.Precision.HIGHEST
    h1 = jnp.maximum(jnp.dot(state, params["w1"], precision=hi) + params["b1"], 0.0)
    h2 = jnp.maximum(jnp.dot(h1, params["w2"], precision=hi) + params["b2"], 0.0)
    mean = jnp.dot(h2, params["wm"], precision=hi) + params["bm"]
    log_std = jnp.clip(jnp.dot(h2, params["ws"], precision=hi) + params["bs"],
                       LOG_STD_MIN, LOG_STD_MAX)
    return mean, log_std


if __name__ == "__main__":
    key = jax.random.PRNGKey(0)
    k_param, k_state1, k_state2 = jax.random.split(key, 3)

    state_dim = 16
    action_dim = 4
    params = init_policy_net_params(k_param, state_dim, action_dim)

    # --- small batch: single exact-size tile, no padding, bf16 matmul path ---
    batch = 2
    state = jax.random.normal(k_state1, (batch, state_dim), dtype=jnp.float32)
    mean, log_std = policy_net_forward(state, params)            # bf16 operands
    jax.block_until_ready((mean, log_std))
    mean_ref, log_std_ref = policy_net_forward_ref(state, params)
    assert mean.shape == (batch, action_dim)
    assert log_std.shape == (batch, action_dim)
    assert jnp.allclose(mean, mean_ref, atol=2e-2, rtol=2e-2)
    assert jnp.allclose(log_std, log_std_ref, atol=2e-2, rtol=2e-2)

    # f32 path should match the f32 reference tightly.
    mean32, log_std32 = policy_net_forward(state, params, use_bf16=False)
    jax.block_until_ready((mean32, log_std32))
    assert jnp.allclose(mean32, mean_ref, atol=1e-4, rtol=1e-4)
    assert jnp.allclose(log_std32, log_std_ref, atol=1e-4, rtol=1e-4)

    # --- ragged batch: exercises grid_b >= 2, even tiles and the batch-pad path ---
    batch2 = 52
    state2 = jax.random.normal(k_state2, (batch2, state_dim), dtype=jnp.float32)
    mean2, log_std2 = policy_net_forward(state2, params)
    jax.block_until_ready((mean2, log_std2))
    mean2_ref, log_std2_ref = policy_net_forward_ref(state2, params)
    assert mean2.shape == (batch2, action_dim)
    assert log_std2.shape == (batch2, action_dim)
    assert jnp.allclose(mean2, mean2_ref, atol=2e-2, rtol=2e-2)
    assert jnp.allclose(log_std2, log_std2_ref, atol=2e-2, rtol=2e-2)

    print("KERNEL_OK")
</pallas_src>

<mosaic_0001>
module attributes {stable_mosaic.version = 11 : i64} {
  func.func @policy_net_kernel(%arg0: i32, %arg1: memref<2x16xf32, #tpu.memory_space<vmem>>, %arg2: memref<16x128xbf16, #tpu.memory_space<vmem>>, %arg3: memref<1x128xf32, #tpu.memory_space<vmem>>, %arg4: memref<128x128xbf16, #tpu.memory_space<vmem>>, %arg5: memref<1x128xf32, #tpu.memory_space<vmem>>, %arg6: memref<128x4xbf16, #tpu.memory_space<vmem>>, %arg7: memref<1x4xf32, #tpu.memory_space<vmem>>, %arg8: memref<128x4xbf16, #tpu.memory_space<vmem>>, %arg9: memref<1x4xf32, #tpu.memory_space<vmem>>, %arg10: memref<2x4xf32, #tpu.memory_space<vmem>>, %arg11: memref<2x4xf32, #tpu.memory_space<vmem>>) attributes {dimension_semantics = [#tpu.dimension_semantics<parallel>], iteration_bounds = array<i64: 1>, scalar_prefetch = 0 : i64, scratch_operands = 0 : i64, tpu.core_type = #tpu.core_type<tc>, window_params = [{transform_indices = @transform_0, window_bounds = array<i64: 2, 16>}, {pipeline_mode = #tpu.pipeline_mode<synchronous>, transform_indices = @transform_1, window_bounds = array<i64: 16, 128>}, {pipeline_mode = #tpu.pipeline_mode<synchronous>, transform_indices = @transform_2, window_bounds = array<i64: 1, 128>}, {pipeline_mode = #tpu.pipeline_mode<synchronous>, transform_indices = @transform_3, window_bounds = array<i64: 128, 128>}, {pipeline_mode = #tpu.pipeline_mode<synchronous>, transform_indices = @transform_4, window_bounds = array<i64: 1, 128>}, {pipeline_mode = #tpu.pipeline_mode<synchronous>, transform_indices = @transform_5, window_bounds = array<i64: 128, 4>}, {pipeline_mode = #tpu.pipeline_mode<synchronous>, transform_indices = @transform_6, window_bounds = array<i64: 1, 4>}, {pipeline_mode = #tpu.pipeline_mode<synchronous>, transform_indices = @transform_7, window_bounds = array<i64: 128, 4>}, {pipeline_mode = #tpu.pipeline_mode<synchronous>, transform_indices = @transform_8, window_bounds = array<i64: 1, 4>}, {transform_indices = @transform_9, window_bounds = array<i64: 2, 4>}, {transform_indices = @transform_10, window_bounds = array<i64: 2, 4>}]} {
    %c0 = arith.constant 0 : index
    %c0_0 = arith.constant 0 : index
    %0 = vector.load %arg1[%c0, %c0_0] : memref<2x16xf32, #tpu.memory_space<vmem>>, vector<2x16xf32>
    %1 = arith.truncf %0 : vector<2x16xf32> to vector<2x16xbf16>
    %c0_1 = arith.constant 0 : index
    %c0_2 = arith.constant 0 : index
    %2 = vector.load %arg2[%c0_1, %c0_2] : memref<16x128xbf16, #tpu.memory_space<vmem>>, vector<16x128xbf16>
    %cst = arith.constant dense<0.000000e+00> : vector<2x128xf32>
    %3 = tpu.matmul %1, %2, %cst {dimension_numbers = #tpu.dot_dimension_numbers<[1], [0], [0], [1], [0, 0, 1, 1], [], []>} : vector<2x16xbf16>, vector<16x128xbf16>, vector<2x128xf32> -> vector<2x128xf32>
    %c0_3 = arith.constant 0 : index
    %c0_4 = arith.constant 0 : index
    %4 = vector.load %arg3[%c0_3, %c0_4] : memref<1x128xf32, #tpu.memory_space<vmem>>, vector<1x128xf32>
    %5 = vector.broadcast %4 : vector<1x128xf32> to vector<2x128xf32>
    %6 = arith.addf %3, %5 : vector<2x128xf32>
    %cst_5 = arith.constant 0.000000e+00 : f32
    %7 = vector.broadcast %cst_5 : f32 to vector<2x128xf32>
    %8 = arith.maximumf %6, %7 : vector<2x128xf32>
    %9 = arith.truncf %8 : vector<2x128xf32> to vector<2x128xbf16>
    %c0_6 = arith.constant 0 : index
    %c0_7 = arith.constant 0 : index
    %10 = vector.load %arg4[%c0_6, %c0_7] : memref<128x128xbf16, #tpu.memory_space<vmem>>, vector<128x128xbf16>
    %cst_8 = arith.constant dense<0.000000e+00> : vector<2x128xf32>
    %11 = tpu.matmul %9, %10, %cst_8 {dimension_numbers = #tpu.dot_dimension_numbers<[1], [0], [0], [1], [0, 0, 1, 1], [], []>} : vector<2x128xbf16>, vector<128x128xbf16>, vector<2x128xf32> -> vector<2x128xf32>
    %c0_9 = arith.constant 0 : index
    %c0_10 = arith.constant 0 : index
    %12 = vector.load %arg5[%c0_9, %c0_10] : memref<1x128xf32, #tpu.memory_space<vmem>>, vector<1x128xf32>
    %13 = vector.broadcast %12 : vector<1x128xf32> to vector<2x128xf32>
    %14 = arith.addf %11, %13 : vector<2x128xf32>
    %cst_11 = arith.constant 0.000000e+00 : f32
    %15 = vector.broadcast %cst_11 : f32 to vector<2x128xf32>
    %16 = arith.maximumf %14, %15 : vector<2x128xf32>
    %17 = arith.truncf %16 : vector<2x128xf32> to vector<2x128xbf16>
    %c0_12 = arith.constant 0 : index
    %c0_13 = arith.constant 0 : index
    %18 = vector.load %arg6[%c0_12, %c0_13] : memref<128x4xbf16, #tpu.memory_space<vmem>>, vector<128x4xbf16>
    %cst_14 = arith.constant dense<0.000000e+00> : vector<2x4xf32>
    %19 = tpu.matmul %17, %18, %cst_14 {dimension_numbers = #tpu.dot_dimension_numbers<[1], [0], [0], [1], [0, 0, 1, 1], [], []>} : vector<2x128xbf16>, vector<128x4xbf16>, vector<2x4xf32> -> vector<2x4xf32>
    %c0_15 = arith.constant 0 : index
    %c0_16 = arith.constant 0 : index
    %20 = vector.load %arg7[%c0_15, %c0_16] : memref<1x4xf32, #tpu.memory_space<vmem>>, vector<1x4xf32>
    %21 = vector.broadcast %20 : vector<1x4xf32> to vector<2x4xf32>
    %22 = arith.addf %19, %21 : vector<2x4xf32>
    %c0_17 = arith.constant 0 : index
    %c0_18 = arith.constant 0 : index
    %23 = vector.load %arg8[%c0_17, %c0_18] : memref<128x4xbf16, #tpu.memory_space<vmem>>, vector<128x4xbf16>
    %cst_19 = arith.constant dense<0.000000e+00> : vector<2x4xf32>
    %24 = tpu.matmul %17, %23, %cst_19 {dimension_numbers = #tpu.dot_dimension_numbers<[1], [0], [0], [1], [0, 0, 1, 1], [], []>} : vector<2x128xbf16>, vector<128x4xbf16>, vector<2x4xf32> -> vector<2x4xf32>
    %c0_20 = arith.constant 0 : index
    %c0_21 = arith.constant 0 : index
    %25 = vector.load %arg9[%c0_20, %c0_21] : memref<1x4xf32, #tpu.memory_space<vmem>>, vector<1x4xf32>
    %26 = vector.broadcast %25 : vector<1x4xf32> to vector<2x4xf32>
    %27 = arith.addf %24, %26 : vector<2x4xf32>
    %c0_22 = arith.constant 0 : index
    %c0_23 = arith.constant 0 : index
    %28 = vector.load %arg10[%c0_22, %c0_23] : memref<2x4xf32, #tpu.memory_space<vmem>>, vector<2x4xf32>
    tpu.vector_store %arg10[%c0_22, %c0_23], %22 {strides = array<i32>} : memref<2x4xf32, #tpu.memory_space<vmem>>, vector<2x4xf32>,
    %cst_24 = arith.constant -2.000000e+01 : f32
    %cst_25 = arith.constant 2.000000e+00 : f32
    %29 = vector.broadcast %cst_24 : f32 to vector<2x4xf32>
    %30 = arith.maximumf %29, %27 : vector<2x4xf32>
    %31 = vector.broadcast %cst_25 : f32 to vector<2x4xf32>
    %32 = arith.minimumf %31, %30 : vector<2x4xf32>
    %c0_26 = arith.constant 0 : index
    %c0_27 = arith.constant 0 : index
    %33 = vector.load %arg11[%c0_26, %c0_27] : memref<2x4xf32, #tpu.memory_space<vmem>>, vector<2x4xf32>
    tpu.vector_store %arg11[%c0_26, %c0_27], %32 {strides = array<i32>} : memref<2x4xf32, #tpu.memory_space<vmem>>, vector<2x4xf32>,
    return
  }
  func.func @transform_0(%arg0: i32) -> (i32, i32) {
    %c0_i32 = arith.constant 0 : i32
    %c0_i32_0 = arith.constant 0 : i32
    return %arg0, %c0_i32 : i32, i32
  }
  func.func @transform_1(%arg0: i32) -> (i32, i32) {
    %c0_i32 = arith.constant 0 : i32
    %c0_i32_0 = arith.constant 0 : i32
    %c0_i32_1 = arith.constant 0 : i32
    return %c0_i32, %c0_i32_0 : i32, i32
  }
  func.func @transform_2(%arg0: i32) -> (i32, i32) {
    %c0_i32 = arith.constant 0 : i32
    %c0_i32_0 = arith.constant 0 : i32
    %c0_i32_1 = arith.constant 0 : i32
    return %c0_i32, %c0_i32_0 : i32, i32
  }
  func.func @transform_3(%arg0: i32) -> (i32, i32) {
    %c0_i32 = arith.constant 0 : i32
    %c0_i32_0 = arith.constant 0 : i32
    %c0_i32_1 = arith.constant 0 : i32
    return %c0_i32, %c0_i32_0 : i32, i32
  }
  func.func @transform_4(%arg0: i32) -> (i32, i32) {
    %c0_i32 = arith.constant 0 : i32
    %c0_i32_0 = arith.constant 0 : i32
    %c0_i32_1 = arith.constant 0 : i32
    return %c0_i32, %c0_i32_0 : i32, i32
  }
  func.func @transform_5(%arg0: i32) -> (i32, i32) {
    %c0_i32 = arith.constant 0 : i32
    %c0_i32_0 = arith.constant 0 : i32
    %c0_i32_1 = arith.constant 0 : i32
    return %c0_i32, %c0_i32_0 : i32, i32
  }
  func.func @transform_6(%arg0: i32) -> (i32, i32) {
    %c0_i32 = arith.constant 0 : i32
    %c0_i32_0 = arith.constant 0 : i32
    %c0_i32_1 = arith.constant 0 : i32
    return %c0_i32, %c0_i32_0 : i32, i32
  }
  func.func @transform_7(%arg0: i32) -> (i32, i32) {
    %c0_i32 = arith.constant 0 : i32
    %c0_i32_0 = arith.constant 0 : i32
    %c0_i32_1 = arith.constant 0 : i32
    return %c0_i32, %c0_i32_0 : i32, i32
  }
  func.func @transform_8(%arg0: i32) -> (i32, i32) {
    %c0_i32 = arith.constant 0 : i32
    %c0_i32_0 = arith.constant 0 : i32
    %c0_i32_1 = arith.constant 0 : i32
    return %c0_i32, %c0_i32_0 : i32, i32
  }
  func.func @transform_9(%arg0: i32) -> (i32, i32) {
    %c0_i32 = arith.constant 0 : i32
    %c0_i32_0 = arith.constant 0 : i32
    return %arg0, %c0_i32 : i32, i32
  }
  func.func @transform_10(%arg0: i32) -> (i32, i32) {
    %c0_i32 = arith.constant 0 : i32
    %c0_i32_0 = arith.constant 0 : i32
    return %arg0, %c0_i32 : i32, i32
  }
}

</mosaic_0001>

<llo_original>
// kernel: tpu_custom_call.1
$region0: #{tpu_custom_call.1}
  #allocation0 [shape = 'u32[]', space=smem, size = 0x4, offset = 0x4, fixed_abs, tag = 'smem constant byte address 0x4 - core index']
  #allocation1 [shape = 'u32[144,128]{1,0:T(1,128)}', space=vmem, size = 0x12000, scoped, tag = 'internal scratch']
  %s0 = inlined_call_operand.vmem [shape: f32[2,16], index: 0, kind: input, shape index: {}]
  %s1 = inlined_call_operand.vmem [shape: bf16[16,128], index: 1, kind: input, shape index: {}]
  %s2 = inlined_call_operand.vmem [shape: f32[1,128], index: 2, kind: input, shape index: {}]
  %s3 = inlined_call_operand.vmem [shape: bf16[128,128], index: 3, kind: input, shape index: {}]
  %s4 = inlined_call_operand.vmem [shape: f32[1,128], index: 4, kind: input, shape index: {}]
  %s5 = inlined_call_operand.vmem [shape: bf16[128,4], index: 5, kind: input, shape index: {}]
  %s6 = inlined_call_operand.vmem [shape: f32[1,4], index: 6, kind: input, shape index: {}]
  %s7 = inlined_call_operand.vmem [shape: bf16[128,4], index: 7, kind: input, shape index: {}]
  %s8 = inlined_call_operand.vmem [shape: f32[1,4], index: 8, kind: input, shape index: {}]
  %s9 = inlined_call_operand.hbm [shape: f32[2,4], index: 9, kind: output, shape index: {0}]
  %s10 = inlined_call_operand.hbm [shape: f32[2,4], index: 10, kind: output, shape index: {1}]
  %11 = xla_tuple %s9, %s10
  %s12 = sld [smem:[#allocation0]]
  $region54: #{tpu_custom_call.1} parent=0
    _
  %s14 = ssub.s32 1, %s12
  %s15 = scalar_select 0, %s14, %s12
  $region1: #{tpu_custom_call.1} parent=0
    #allocation2 [shape = 'u8[1024]{0}', space=vmem, size = 0x400, scoped, tag = 'output window, operand 0, single buffered']
    #allocation3 [shape = 's32[1]{0}', space=sflag, size = 0x4, scoped, tag = 'scoped memory for tpu_custom_call.1']
    #allocation4 [shape = 'u8[1024]{0}', space=vmem, size = 0x400, scoped, tag = 'output window, operand 1, single buffered']
    #allocation5 [shape = 's32[1]{0}', space=sflag, size = 0x4, scoped, tag = 'scoped memory for tpu_custom_call.1']
    %16 = vsyncpa [#allocation3], 0
    %17 = vsyncpa [#allocation5], 0
    // Predicated region
    $region2: #{tpu_custom_call.1} parent=1 // pred_check
      _
    $region3: #{tpu_custom_call.1} parent=1 // pred_check_branch
      %19 = sbr.rel (0) target = $region5
    $region4: #{tpu_custom_call.1} parent=1 // pred_region
      _
    $region5: #{tpu_custom_call.1} parent=1 // pred_fallthru
      _
    // Predicated region
    $region6: #{tpu_custom_call.1} parent=1 // pred_check
      _
    $region7: #{tpu_custom_call.1} parent=1 // pred_check_branch
      %21 = sbr.rel (0) target = $region9
    $region8: #{tpu_custom_call.1} parent=1 // pred_region
      _
    $region9: #{tpu_custom_call.1} parent=1 // pred_fallthru
      _
    // Predicated region
    $region10: #{tpu_custom_call.1} parent=1 // pred_check
      _
    $region11: #{tpu_custom_call.1} parent=1 // pred_check_branch
      %23 = sbr.rel (0) target = $region13
    $region12: #{tpu_custom_call.1} parent=1 // pred_region
      _
    $region13: #{tpu_custom_call.1} parent=1 // pred_fallthru
      _
    // Predicated region
    $region14: #{tpu_custom_call.1} parent=1 // pred_check
      _
    $region15: #{tpu_custom_call.1} parent=1 // pred_check_branch
      %25 = sbr.rel (0) target = $region17
    $region16: #{tpu_custom_call.1} parent=1 // pred_region
      _
    $region17: #{tpu_custom_call.1} parent=1 // pred_fallthru
      _
    // Predicated region
    $region18: #{tpu_custom_call.1} parent=1 // pred_check
      _
    $region19: #{tpu_custom_call.1} parent=1 // pred_check_branch
      %27 = sbr.rel (0) target = $region21
    $region20: #{tpu_custom_call.1} parent=1 // pred_region
      _
    $region21: #{tpu_custom_call.1} parent=1 // pred_fallthru
      _
    // Predicated region
    $region22: #{tpu_custom_call.1} parent=1 // pred_check
      _
    $region23: #{tpu_custom_call.1} parent=1 // pred_check_branch
      %29 = sbr.rel (0) target = $region25
    $region24: #{tpu_custom_call.1} parent=1 // pred_region
      _
    $region25: #{tpu_custom_call.1} parent=1 // pred_fallthru
      _
    // Predicated region
    $region26: #{tpu_custom_call.1} parent=1 // pred_check
      _
    $region27: #{tpu_custom_call.1} parent=1 // pred_check_branch
      %31 = sbr.rel (0) target = $region29
    $region28: #{tpu_custom_call.1} parent=1 // pred_region
      _
    $region29: #{tpu_custom_call.1} parent=1 // pred_fallthru
      _
    // Predicated region
    $region30: #{tpu_custom_call.1} parent=1 // pred_check
      _
    $region31: #{tpu_custom_call.1} parent=1 // pred_check_branch
      %33 = sbr.rel (0) target = $region33
    $region32: #{tpu_custom_call.1} parent=1 // pred_region
      _
    $region33: #{tpu_custom_call.1} parent=1 // pred_fallthru
      _
    // Predicated region
    $region34: #{tpu_custom_call.1} parent=1 // pred_check
      _
    $region35: #{tpu_custom_call.1} parent=1 // pred_check_branch
      %35 = sbr.rel (0) target = $region37
    $region36: #{tpu_custom_call.1} parent=1 // pred_region
      _
    $region37: #{tpu_custom_call.1} parent=1 // pred_fallthru
      _
    %v37 = vld [vmem:[%s0] sm:$0x3]
    %v38 = vpack.c.bf16 %v37, %v37
    %v39 = vld [vmem:[%s1] sm:$0xf]
    %v40 = vld [vmem:[%s1 + $0x4] sm:$0xf]
    %v41 = vld [vmem:[%s2] sm:$0x1]
    %v43 = vlaneseq
    %v44 = vshrl.u32 %v43, 7
    %v45 = vsub.s32 0, %v44
    %v46 = vrot.slane %v41, %v45
    %v50 = vunpack.c.l.b16 %v39
    %v51 = vunpack.c.l.b16 %v40
    %v52 = vpack.c.b16 %v51, %v50
    %vm54 = vcmask 130048
    %v56 = vsel %vm54, %v38, 0
    %58 = vmatprep.subr.bf16.mxu0 0
    %59 = vmatpush1.bf16.msra.mxu0 %v52
    %60 = vmatprep.subr.bf16.mxu0 0
    %61 = vmatpush1.bf16.msra.mxu0 0
    %62 = vmatprep.subr.bf16.mxu0 0
    %63 = vmatpush1.bf16.msra.mxu0 0
    %64 = vmatprep.subr.bf16.mxu0 0
    %65 = vmatpush1.bf16.msra.mxu0 0
    %66 = vmatprep.subr.bf16.mxu0 0
    %67 = vmatpush1.bf16.msra.mxu0 0
    %68 = vmatprep.subr.bf16.mxu0 0
    %69 = vmatpush1.bf16.msra.mxu0 0
    %70 = vmatprep.subr.bf16.mxu0 0
    %71 = vmatpush1.bf16.msra.mxu0 0
    %72 = vmatprep.subr.bf16.mxu0 0
    %73 = vmatpush1.bf16.msra.mxu0 0
    %74 = vmatprep.subr.bf16.mxu0 0
    %75 = vmatpush1.bf16.msra.mxu0 0
    %76 = vmatprep.subr.bf16.mxu0 0
    %77 = vmatpush1.bf16.msra.mxu0 0
    %78 = vmatprep.subr.bf16.mxu0 0
    %79 = vmatpush1.bf16.msra.mxu0 0
    %80 = vmatprep.subr.bf16.mxu0 0
    %81 = vmatpush1.bf16.msra.mxu0 0
    %82 = vmatprep.subr.bf16.mxu0 0
    %83 = vmatpush1.bf16.msra.mxu0 0
    %84 = vmatprep.subr.bf16.mxu0 0
    %85 = vmatpush1.bf16.msra.mxu0 0
    %86 = vmatprep.subr.bf16.mxu0 0
    %87 = vmatpush1.bf16.msra.mxu0 0
    %88 = vmatprep.subr.bf16.mxu0 0
    %89 = vmatpush1.bf16.msra.mxu0 0
    %90 = vmatprep.mubr.bf16.mxu0 0
    %91 = vmatmul.mubr.bf16.gmra.mrb[0].mxu0 %v56
    %v92 = vpop.f32.mrb[0].mxu0
    %v93 = vadd.f32 %v46, %v92
    %v94 = vpop.f32.mrb[0].mxu0
    %v95 = vpop.f32.mrb[0].mxu0
    %v96 = vpop.f32.mrb[0].mxu0
    %97 = vdwg.mxu0
    %v98 = vmax.f32 %v93, 0.0
    %v99 = vpack.c.bf16 %v98, %v98
    %v100 = vld [vmem:[%s3] sm:$0xf]
    %v101 = vld [vmem:[%s3 + $0x4] sm:$0xf]
    %v102 = vld [vmem:[%s3 + $0x8] sm:$0xf]
    %v103 = vld [vmem:[%s3 + $0xc] sm:$0xf]
    %v104 = vld [vmem:[%s3 + $0x10] sm:$0xf]
    %v105 = vld [vmem:[%s3 + $0x14] sm:$0xf]
    %v106 = vld [vmem:[%s3 + $0x18] sm:$0xf]
    %v107 = vld [vmem:[%s3 + $0x1c] sm:$0xf]
    %v108 = vld [vmem:[%s3 + $0x20] sm:$0xf]
    %v109 = vld [vmem:[%s3 + $0x24] sm:$0xf]
    %v110 = vld [vmem:[%s3 + $0x28] sm:$0xf]
    %v111 = vld [vmem:[%s3 + $0x2c] sm:$0xf]
    %v112 = vld [vmem:[%s3 + $0x30] sm:$0xf]
    %v113 = vld [vmem:[%s3 + $0x34] sm:$0xf]
    %v114 = vld [vmem:[%s3 + $0x38] sm:$0xf]
    %v115 = vld [vmem:[%s3 + $0x3c] sm:$0xf]
    %v116 = vld [vmem:[%s4] sm:$0x1]
    %v118 = vlaneseq
    %v119 = vshrl.u32 %v118, 7
    %v120 = vsub.s32 0, %v119
    %v121 = vrot.slane %v116, %v120
    %v139 = vunpack.c.l.b16 %v100
    %v140 = vunpack.c.l.b16 %v101
    %v141 = vunpack.c.l.b16 %v102
    %v142 = vunpack.c.l.b16 %v103
    %v143 = vunpack.c.l.b16 %v104
    %v144 = vunpack.c.l.b16 %v105
    %v145 = vunpack.c.l.b16 %v106
    %v146 = vunpack.c.l.b16 %v107
    %v147 = vunpack.c.l.b16 %v108
    %v148 = vunpack.c.l.b16 %v109
    %v149 = vunpack.c.l.b16 %v110
    %v150 = vunpack.c.l.b16 %v111
    %v151 = vunpack.c.l.b16 %v112
    %v152 = vunpack.c.l.b16 %v113
    %v153 = vunpack.c.l.b16 %v114
    %v154 = vunpack.c.l.b16 %v115
    %v155 = vpack.c.b16 %v140, %v139
    %v156 = vpack.c.b16 %v142, %v141
    %v157 = vpack.c.b16 %v144, %v143
    %v158 = vpack.c.b16 %v146, %v145
    %v159 = vpack.c.b16 %v148, %v147
    %v160 = vpack.c.b16 %v150, %v149
    %v161 = vpack.c.b16 %v152, %v151
    %v162 = vpack.c.b16 %v154, %v153
    %171 = vmatprep.subr.bf16.mxu0 0
    %172 = vmatpush1.bf16.msra.mxu0 %v155
    %173 = vmatprep.subr.bf16.mxu0 0
    %174 = vmatpush1.bf16.msra.mxu0 %v156
    %175 = vmatprep.subr.bf16.mxu0 0
    %176 = vmatpush1.bf16.msra.mxu0 %v157
    %177 = vmatprep.subr.bf16.mxu0 0
    %178 = vmatpush1.bf16.msra.mxu0 %v158
    %179 = vmatprep.subr.bf16.mxu0 0
    %180 = vmatpush1.bf16.msra.mxu0 %v159
    %181 = vmatprep.subr.bf16.mxu0 0
    %182 = vmatpush1.bf16.msra.mxu0 %v160
    %183 = vmatprep.subr.bf16.mxu0 0
    %184 = vmatpush1.bf16.msra.mxu0 %v161
    %185 = vmatprep.subr.bf16.mxu0 0
    %186 = vmatpush1.bf16.msra.mxu0 %v162
    %187 = vmatprep.subr.bf16.mxu0 0
    %188 = vmatpush1.bf16.msra.mxu0 0
    %189 = vmatprep.subr.bf16.mxu0 0
    %190 = vmatpush1.bf16.msra.mxu0 0
    %191 = vmatprep.subr.bf16.mxu0 0
    %192 = vmatpush1.bf16.msra.mxu0 0
    %193 = vmatprep.subr.bf16.mxu0 0
    %194 = vmatpush1.bf16.msra.mxu0 0
    %195 = vmatprep.subr.bf16.mxu0 0
    %196 = vmatpush1.bf16.msra.mxu0 0
    %197 = vmatprep.subr.bf16.mxu0 0
    %198 = vmatpush1.bf16.msra.mxu0 0
    %199 = vmatprep.subr.bf16.mxu0 0
    %200 = vmatpush1.bf16.msra.mxu0 0
    %201 = vmatprep.subr.bf16.mxu0 0
    %202 = vmatpush1.bf16.msra.mxu0 0
    %203 = vmatprep.mubr.bf16.mxu0 0
    %204 = vmatmul.mubr.bf16.gmra.mrb[0].mxu0 %v99
    %v205 = vpop.f32.mrb[0].mxu0
    %v206 = vadd.f32 %v121, %v205
    %v207 = vpop.f32.mrb[0].mxu0
    %v208 = vpop.f32.mrb[0].mxu0
    %v209 = vpop.f32.mrb[0].mxu0
    %210 = vdwg.mxu0
    %v211 = vmax.f32 %v206, 0.0
    %v212 = vpack.c.bf16 %v211, %v211
    %v213 = vld [vmem:[%s5] sm:$0xf]
    %v214 = vld [vmem:[%s5 + $0x4] sm:$0xf]
    %v215 = vld [vmem:[%s5 + $0x8] sm:$0xf]
    %v216 = vld [vmem:[%s5 + $0xc] sm:$0xf]
    %v217 = vld [vmem:[%s5 + $0x10] sm:$0xf]
    %v218 = vld [vmem:[%s5 + $0x14] sm:$0xf]
    %v219 = vld [vmem:[%s5 + $0x18] sm:$0xf]
    %v220 = vld [vmem:[%s5 + $0x1c] sm:$0xf]
    %v221 = vld [vmem:[%s5 + $0x20] sm:$0xf]
    %v222 = vld [vmem:[%s5 + $0x24] sm:$0xf]
    %v223 = vld [vmem:[%s5 + $0x28] sm:$0xf]
    %v224 = vld [vmem:[%s5 + $0x2c] sm:$0xf]
    %v225 = vld [vmem:[%s5 + $0x30] sm:$0xf]
    %v226 = vld [vmem:[%s5 + $0x34] sm:$0xf]
    %v227 = vld [vmem:[%s5 + $0x38] sm:$0xf]
    %v228 = vld [vmem:[%s5 + $0x3c] sm:$0xf]
    %v229 = vld [vmem:[%s6] sm:$0x1]
    %v231 = vlaneseq
    %v232 = vshrl.u32 %v231, 7
    %v233 = vsub.s32 0, %v232
    %v234 = vrot.slane %v229, %v233
    %v252 = vunpack.c.l.b16 %v213
    %v253 = vunpack.c.l.b16 %v214
    %v254 = vunpack.c.l.b16 %v215
    %v255 = vunpack.c.l.b16 %v216
    %v256 = vunpack.c.l.b16 %v217
    %v257 = vunpack.c.l.b16 %v218
    %v258 = vunpack.c.l.b16 %v219
    %v259 = vunpack.c.l.b16 %v220
    %v260 = vunpack.c.l.b16 %v221
    %v261 = vunpack.c.l.b16 %v222
    %v262 = vunpack.c.l.b16 %v223
    %v263 = vunpack.c.l.b16 %v224
    %v264 = vunpack.c.l.b16 %v225
    %v265 = vunpack.c.l.b16 %v226
    %v266 = vunpack.c.l.b16 %v227
    %v267 = vunpack.c.l.b16 %v228
    %v268 = vpack.c.b16 %v253, %v252
    %v269 = vpack.c.b16 %v255, %v254
    %v270 = vpack.c.b16 %v257, %v256
    %v271 = vpack.c.b16 %v259, %v258
    %v272 = vpack.c.b16 %v261, %v260
    %v273 = vpack.c.b16 %v263, %v262
    %v274 = vpack.c.b16 %v265, %v264
    %v275 = vpack.c.b16 %v267, %v266
    %284 = vmatprep.subr.bf16.mxu0 0
    %285 = vmatpush1.bf16.msra.mxu0 %v268
    %286 = vmatprep.subr.bf16.mxu0 0
    %287 = vmatpush1.bf16.msra.mxu0 %v269
    %288 = vmatprep.subr.bf16.mxu0 0
    %289 = vmatpush1.bf16.msra.mxu0 %v270
    %290 = vmatprep.subr.bf16.mxu0 0
    %291 = vmatpush1.bf16.msra.mxu0 %v271
    %292 = vmatprep.subr.bf16.mxu0 0
    %293 = vmatpush1.bf16.msra.mxu0 %v272
    %294 = vmatprep.subr.bf16.mxu0 0
    %295 = vmatpush1.bf16.msra.mxu0 %v273
    %296 = vmatprep.subr.bf16.mxu0 0
    %297 = vmatpush1.bf16.msra.mxu0 %v274
    %298 = vmatprep.subr.bf16.mxu0 0
    %299 = vmatpush1.bf16.msra.mxu0 %v275
    %300 = vmatprep.subr.bf16.mxu0 0
    %301 = vmatpush1.bf16.msra.mxu0 0
    %302 = vmatprep.subr.bf16.mxu0 0
    %303 = vmatpush1.bf16.msra.mxu0 0
    %304 = vmatprep.subr.bf16.mxu0 0
    %305 = vmatpush1.bf16.msra.mxu0 0
    %306 = vmatprep.subr.bf16.mxu0 0
    %307 = vmatpush1.bf16.msra.mxu0 0
    %308 = vmatprep.subr.bf16.mxu0 0
    %309 = vmatpush1.bf16.msra.mxu0 0
    %310 = vmatprep.subr.bf16.mxu0 0
    %311 = vmatpush1.bf16.msra.mxu0 0
    %312 = vmatprep.subr.bf16.mxu0 0
    %313 = vmatpush1.bf16.msra.mxu0 0
    %314 = vmatprep.subr.bf16.mxu0 0
    %315 = vmatpush1.bf16.msra.mxu0 0
    %316 = vmatprep.mubr.bf16.mxu0 0
    %317 = vmatmul.mubr.bf16.gmra.mrb[0].mxu0 %v212
    %v318 = vpop.f32.mrb[0].mxu0
    %v319 = vadd.f32 %v234, %v318
    %v320 = vpop.f32.mrb[0].mxu0
    %v321 = vpop.f32.mrb[0].mxu0
    %v322 = vpop.f32.mrb[0].mxu0
    %323 = vdwg.mxu0
    %v324 = vld [vmem:[%s7] sm:$0xf]
    %v325 = vld [vmem:[%s7 + $0x4] sm:$0xf]
    %v326 = vld [vmem:[%s7 + $0x8] sm:$0xf]
    %v327 = vld [vmem:[%s7 + $0xc] sm:$0xf]
    %v328 = vld [vmem:[%s7 + $0x10] sm:$0xf]
    %v329 = vld [vmem:[%s7 + $0x14] sm:$0xf]
    %v330 = vld [vmem:[%s7 + $0x18] sm:$0xf]
    %v331 = vld [vmem:[%s7 + $0x1c] sm:$0xf]
    %v332 = vld [vmem:[%s7 + $0x20] sm:$0xf]
    %v333 = vld [vmem:[%s7 + $0x24] sm:$0xf]
    %v334 = vld [vmem:[%s7 + $0x28] sm:$0xf]
    %v335 = vld [vmem:[%s7 + $0x2c] sm:$0xf]
    %v336 = vld [vmem:[%s7 + $0x30] sm:$0xf]
    %v337 = vld [vmem:[%s7 + $0x34] sm:$0xf]
    %v338 = vld [vmem:[%s7 + $0x38] sm:$0xf]
    %v339 = vld [vmem:[%s7 + $0x3c] sm:$0xf]
    %v340 = vld [vmem:[%s8] sm:$0x1]
    %v342 = vlaneseq
    %v343 = vshrl.u32 %v342, 7
    %v344 = vsub.s32 0, %v343
    %v345 = vrot.slane %v340, %v344
    %v363 = vunpack.c.l.b16 %v324
    %v364 = vunpack.c.l.b16 %v325
    %v365 = vunpack.c.l.b16 %v326
    %v366 = vunpack.c.l.b16 %v327
    %v367 = vunpack.c.l.b16 %v328
    %v368 = vunpack.c.l.b16 %v329
    %v369 = vunpack.c.l.b16 %v330
    %v370 = vunpack.c.l.b16 %v331
    %v371 = vunpack.c.l.b16 %v332
    %v372 = vunpack.c.l.b16 %v333
    %v373 = vunpack.c.l.b16 %v334
    %v374 = vunpack.c.l.b16 %v335
    %v375 = vunpack.c.l.b16 %v336
    %v376 = vunpack.c.l.b16 %v337
    %v377 = vunpack.c.l.b16 %v338
    %v378 = vunpack.c.l.b16 %v339
    %v379 = vpack.c.b16 %v364, %v363
    %v380 = vpack.c.b16 %v366, %v365
    %v381 = vpack.c.b16 %v368, %v367
    %v382 = vpack.c.b16 %v370, %v369
    %v383 = vpack.c.b16 %v372, %v371
    %v384 = vpack.c.b16 %v374, %v373
    %v385 = vpack.c.b16 %v376, %v375
    %v386 = vpack.c.b16 %v378, %v377
    %395 = vmatprep.subr.bf16.mxu0 0
    %396 = vmatpush1.bf16.msra.mxu0 %v379
    %397 = vmatprep.subr.bf16.mxu0 0
    %398 = vmatpush1.bf16.msra.mxu0 %v380
    %399 = vmatprep.subr.bf16.mxu0 0
    %400 = vmatpush1.bf16.msra.mxu0 %v381
    %401 = vmatprep.subr.bf16.mxu0 0
    %402 = vmatpush1.bf16.msra.mxu0 %v382
    %403 = vmatprep.subr.bf16.mxu0 0
    %404 = vmatpush1.bf16.msra.mxu0 %v383
    %405 = vmatprep.subr.bf16.mxu0 0
    %406 = vmatpush1.bf16.msra.mxu0 %v384
    %407 = vmatprep.subr.bf16.mxu0 0
    %408 = vmatpush1.bf16.msra.mxu0 %v385
    %409 = vmatprep.subr.bf16.mxu0 0
    %410 = vmatpush1.bf16.msra.mxu0 %v386
    %411 = vmatprep.subr.bf16.mxu0 0
    %412 = vmatpush1.bf16.msra.mxu0 0
    %413 = vmatprep.subr.bf16.mxu0 0
    %414 = vmatpush1.bf16.msra.mxu0 0
    %415 = vmatprep.subr.bf16.mxu0 0
    %416 = vmatpush1.bf16.msra.mxu0 0
    %417 = vmatprep.subr.bf16.mxu0 0
    %418 = vmatpush1.bf16.msra.mxu0 0
    %419 = vmatprep.subr.bf16.mxu0 0
    %420 = vmatpush1.bf16.msra.mxu0 0
    %421 = vmatprep.subr.bf16.mxu0 0
    %422 = vmatpush1.bf16.msra.mxu0 0
    %423 = vmatprep.subr.bf16.mxu0 0
    %424 = vmatpush1.bf16.msra.mxu0 0
    %425 = vmatprep.subr.bf16.mxu0 0
    %426 = vmatpush1.bf16.msra.mxu0 0
    %427 = vmatprep.mubr.bf16.mxu0 0
    %428 = vmatmul.mubr.bf16.gmra.mrb[0].mxu0 %v212
    %v429 = vpop.f32.mrb[0].mxu0
    %v430 = vadd.f32 %v345, %v429
    %v431 = vpop.f32.mrb[0].mxu0
    %v432 = vpop.f32.mrb[0].mxu0
    %v433 = vpop.f32.mrb[0].mxu0
    %434 = vdwg.mxu0
    %vm435 = vcmask 25600
    %436 = vst.msk [vmem:[#allocation2] sm:$0x3] %vm435, %v319
    %v437 = vmax.f32 %v430, -20.0
    %v438 = vmin.f32 %v437, 2.0
    %439 = vst.msk [vmem:[#allocation4] sm:$0x3] %vm435, %v438
    // Predicated region
    $region38: #{tpu_custom_call.1} parent=1 // pred_check
      _
    $region39: #{tpu_custom_call.1} parent=1 // pred_check_branch
      %441 = sbr.rel (0) target = $region41
    $region40: #{tpu_custom_call.1} parent=1 // pred_region
      %s443 = ssub.s32 32, 32
      %444 = vsyncadd [#allocation3], %s443
      %s446 = sshll.u32 [#allocation2], 4
      %s447 = int_to_ptr.vmem [resolvable:$true] %s446
      %449 = dma.vmem_to_hbm [thread:$0]  %s447, 32, %s9, [#allocation3]
    $region41: #{tpu_custom_call.1} parent=1 // pred_fallthru
      _
    // Predicated region
    $region42: #{tpu_custom_call.1} parent=1 // pred_check
      _
    $region43: #{tpu_custom_call.1} parent=1 // pred_check_branch
      %451 = sbr.rel (0) target = $region45
    $region44: #{tpu_custom_call.1} parent=1 // pred_region
      %s453 = ssub.s32 32, 32
      %454 = vsyncadd [#allocation5], %s453
      %s456 = sshll.u32 [#allocation4], 4
      %s457 = int_to_ptr.vmem [resolvable:$true] %s456
      %459 = dma.vmem_to_hbm [thread:$0]  %s457, 32, %s10, [#allocation5]
    $region45: #{tpu_custom_call.1} parent=1 // pred_fallthru
      _
    // Predicated region
    $region46: #{tpu_custom_call.1} parent=1 // pred_check
      _
    $region47: #{tpu_custom_call.1} parent=1 // pred_check_branch
      %461 = sbr.rel (0) target = $region49
    $region48: #{tpu_custom_call.1} parent=1 // pred_region
      %462 = dma.done [#allocation3], 32
    $region49: #{tpu_custom_call.1} parent=1 // pred_fallthru
      _
    // Predicated region
    $region50: #{tpu_custom_call.1} parent=1 // pred_check
      _
    $region51: #{tpu_custom_call.1} parent=1 // pred_check_branch
      %464 = sbr.rel (0) target = $region53
    $region52: #{tpu_custom_call.1} parent=1 // pred_region
      %465 = dma.done [#allocation5], 32
    $region53: #{tpu_custom_call.1} parent=1 // pred_fallthru
      _
    %466 = vsyncpa [#allocation3], 1
    %467 = vsyncpa [#allocation5], 1

</llo_original>
